<compile_context>
chip_gen: v7x
topology: tpu7x:2x2x1
jax: 0.10.0
libtpu: 0.0.40
codegen_flags: <defaults>
</compile_context>

<pallas_src>
import functools

import jax
import jax.numpy as jnp
from jax import lax
from jax.experimental import pallas as pl
from jax.experimental.pallas import tpu as pltpu


def _unpool_kernel(x_ref, o_ref, *, s: int, rows: int, ow: int):
    """x_ref: (ct, RT, W)  ->  o_ref: (ct, RT*s or OH, OW).

    Zero-fill the output block, then place the lane-interleaved input rows
    into output rows 0, s, 2s, ...  `rows` = number of input rows placed.
    """
    if s == 1:
        o_ref[...] = x_ref[:, : o_ref.shape[1], : o_ref.shape[2]]
        return

    _, _, w = x_ref.shape
    w_eff = min(w, -(-ow // s))        # input columns that survive the crop

    # 1) One dense splat store zero-fills the whole output block.
    o_ref[...] = jnp.zeros_like(o_ref)

    # 2) Lane (W) interleave at 1/s of the output size:
    #    output col j holds x[..., j // s] iff j % s == 0.
    x = x_ref[:, :rows, :w_eff]                       # (ct, rows, w_eff)
    xw = jnp.repeat(x, s, axis=2)                     # (ct, rows, w_eff*s)
    if w_eff * s != ow:
        xw = xw[:, :, :ow]                            # column crop (rare)
    col = lax.broadcasted_iota(jnp.int32, (1, 1, ow), 2)
    xw = jnp.where(col % s == 0, xw, jnp.zeros_like(xw))

    # 3) Place each populated output row (static unrolled stores; the rows in
    #    between stay zero from step 1).
    for i in range(rows):
        o_ref[:, i * s, :] = xw[:, i, :]


def _vmem_tile_bytes(sub: int, lane: int, itemsize: int) -> int:
    """(8,128)-padded VMEM footprint of one channel's (sub, lane) tile."""
    return (-(-sub // 8) * 8) * (-(-lane // 128) * 128) * itemsize


_ROW_UNROLL_MAX = 16   # cap on unrolled per-row stores inside one block
_MIN_GRID_STEPS = 4    # >= 2 pipelined steps per TensorCore on v7x


def _plan(bc, h, w, oh, ow, s, itemsize):
    """Pick the channel block `ct`, row tiling, grid and VMEM limit."""
    h_eff = min(h, -(-oh // s))        # input rows that survive the crop

    # Row tiling: one row block when the unroll is small, otherwise blocks of
    # _ROW_UNROLL_MAX input rows (multiple of 8 keeps blocks sublane-aligned).
    if h_eff <= _ROW_UNROLL_MAX:
        rt_in, rows, orows, nrb = h, h_eff, oh, 1
    else:
        rt_in = _ROW_UNROLL_MAX
        rows = rt_in
        orows = rt_in * s
        nrb = -(-oh // orows)

    # Generation-aware VMEM budget (~3/8 of capacity; limit = capacity / 2).
    try:
        vmem_cap = int(pltpu.get_tpu_info().vmem_capacity_bytes)
    except Exception:
        vmem_cap = 64 * 1024 * 1024    # conservative (v7x per-core VMEM)
    budget = (vmem_cap * 3) // 8
    vmem_limit = vmem_cap // 2

    # Per-channel VMEM: 3 input buffers (Buffered(3)), 2 output buffers, and
    # ~2 tile-sized in-kernel temporaries (the lane-interleaved value + slack).
    per_c = (3 * _vmem_tile_bytes(rt_in, w, itemsize)
             + 2 * _vmem_tile_bytes(orows, ow, itemsize)
             + 2 * _vmem_tile_bytes(rows, ow, itemsize))
    ct = max(1, min(bc, budget // max(per_c, 1)))

    # Keep >= _MIN_GRID_STEPS total grid steps (extra step ~0.35 us) so the
    # pipeline / both v7x TensorCores have iterations to overlap.
    need_cb = -(-_MIN_GRID_STEPS // nrb)
    if need_cb > 1 and bc > 1:
        ct = min(ct, -(-bc // min(need_cb, bc)))

    ncb = -(-bc // ct)                 # cdiv: ragged last channel block is OK
    return ct, rt_in, rows, orows, nrb, ncb, vmem_limit


def better_max_unpool(x: jax.Array, shape: int, output_shape) -> jax.Array:
    """Pallas TPU implementation of BetterMaxUnpool.forward (NCHW)."""
    b, c, h, w = x.shape
    s = int(shape)
    oh_req, ow_req = int(output_shape[0]), int(output_shape[1])

    # Same validity checks as the PyTorch module.
    if not (oh_req - h * s < s):
        raise Exception("output_shape[0] wrong")
    if not (ow_req - w * s < s):
        raise Exception("output_shape[1] wrong")
    # torch's `[..., :oh, :ow]` clamps to the upsampled extent; mirror that.
    oh = min(oh_req, h * s)
    ow = min(ow_req, w * s)

    bc = b * c
    itemsize = int(jnp.dtype(x.dtype).itemsize)
    ct, rt_in, rows, orows, nrb, ncb, vmem_limit = _plan(
        bc, h, w, oh, ow, s, itemsize)
    grid = (ncb, nrb)

    kernel = functools.partial(_unpool_kernel, s=s, rows=rows, ow=ow)
    x2 = x.reshape(bc, h, w)

    def _run(input_buffers: int) -> jax.Array:
        in_block = (ct, rt_in, w)
        in_map = lambda i, j: (i, j, 0)
        if input_buffers > 2:
            in_spec = pl.BlockSpec(in_block, in_map,
                                   pipeline_mode=pl.Buffered(input_buffers))
        else:
            in_spec = pl.BlockSpec(in_block, in_map)
        return pl.pallas_call(
            kernel,
            out_shape=jax.ShapeDtypeStruct((bc, oh, ow), x.dtype),
            grid=grid,
            in_specs=[in_spec],
            out_specs=pl.BlockSpec((ct, orows, ow), lambda i, j: (i, j, 0)),
            compiler_params=pltpu.CompilerParams(
                dimension_semantics=("parallel", "parallel"),
                vmem_limit_bytes=vmem_limit,
            ),
            cost_estimate=pl.CostEstimate(
                flops=0,
                transcendentals=0,
                bytes_accessed=itemsize * (bc * h * w + bc * oh * ow),
            ),
        )(x2)

    try:
        # Triple-buffer the (s^2-smaller) input stream so its DMA never
        # serializes behind the much larger output writeback.
        out = _run(3)
    except Exception:
        out = _run(2)   # fallback: default double-buffering

    return out.reshape(b, c, oh, ow)


def _reference(x, s, output_shape):
    # Pure-JAX reference mirroring the torch code (zeros -> assign -> reshape -> crop).
    b, c, h, w = x.shape
    out = jnp.zeros((b, c, h, s, w, s), dtype=x.dtype)
    out = out.at[:, :, :, 0, :, 0].set(x)
    out = out.reshape(b, c, h * s, w * s)
    return out[:, :, :output_shape[0], :output_shape[1]]


if __name__ == "__main__":
    # Case 1: typical use -- upsample x2 with a row crop.
    B, C, H, W = 2, 4, 8, 8
    s = 2
    output_shape = (15, 16)          # crops one row off the 16x16 upsampled map
    x = jax.random.normal(jax.random.PRNGKey(0), (B, C, H, W), dtype=jnp.float32)
    out = jax.block_until_ready(better_max_unpool(x, s, output_shape))
    assert out.shape == (B, C, 15, 16), out.shape
    assert jnp.allclose(out, _reference(x, s, output_shape)), "case 1 mismatch"

    # Case 2: stride 3 with a column crop (exercises the post-repeat crop path).
    x2 = jax.random.normal(jax.random.PRNGKey(1), (2, 4, 8, 8), dtype=jnp.float32)
    out2 = jax.block_until_ready(better_max_unpool(x2, 3, (24, 23)))
    assert jnp.allclose(out2, _reference(x2, 3, (24, 23))), "case 2 mismatch"

    # Case 3: larger spatial map (exercises row tiling + ragged blocks).
    x3 = jax.random.normal(jax.random.PRNGKey(2), (2, 2, 24, 24), dtype=jnp.float32)
    out3 = jax.block_until_ready(better_max_unpool(x3, 2, (48, 48)))
    assert jnp.allclose(out3, _reference(x3, 2, (48, 48))), "case 3 mismatch"

    print("KERNEL_OK")
</pallas_src>

<mosaic_0001>
module attributes {stable_mosaic.version = 11 : i64} {
  func.func @_unpool_kernel(%arg0: i32, %arg1: i32, %arg2: memref<2x8x8xf32, #tpu.memory_space<vmem>>, %arg3: memref<2x15x16xf32, #tpu.memory_space<vmem>>) attributes {dimension_semantics = [#tpu.dimension_semantics<parallel>, #tpu.dimension_semantics<parallel>], iteration_bounds = array<i64: 4, 1>, scalar_prefetch = 0 : i64, scratch_operands = 0 : i64, tpu.core_type = #tpu.core_type<tc>, window_params = [{transform_indices = @transform_0, window_bounds = array<i64: 2, 8, 8>}, {transform_indices = @transform_1, window_bounds = array<i64: 2, 15, 16>}]} {
    %cst = arith.constant 0.000000e+00 : f32
    %0 = vector.broadcast %cst : f32 to vector<2x15x16xf32>
    %c0 = arith.constant 0 : index
    %c0_0 = arith.constant 0 : index
    %c0_1 = arith.constant 0 : index
    %1 = vector.load %arg3[%c0, %c0_0, %c0_1] : memref<2x15x16xf32, #tpu.memory_space<vmem>>, vector<2x15x16xf32>
    tpu.vector_store %arg3[%c0, %c0_0, %c0_1], %0 {strides = array<i32>} : memref<2x15x16xf32, #tpu.memory_space<vmem>>, vector<2x15x16xf32>,
    %c0_2 = arith.constant 0 : index
    %c0_3 = arith.constant 0 : index
    %c0_4 = arith.constant 0 : index
    %2 = vector.load %arg2[%c0_2, %c0_3, %c0_4] : memref<2x8x8xf32, #tpu.memory_space<vmem>>, vector<2x8x8xf32>
    %3 = vector.shape_cast %2 : vector<2x8x8xf32> to vector<2x8x8x1xf32>
    %4 = vector.broadcast %3 : vector<2x8x8x1xf32> to vector<2x8x8x2xf32>
    %5 = vector.shape_cast %4 : vector<2x8x8x2xf32> to vector<2x8x16xf32>
    %6 = tpu.iota {dimensions = array<i32: 2>} : vector<1x1x16xi32>
    %c2_i32 = arith.constant 2 : i32
    %c0_i32 = arith.constant 0 : i32
    %7 = arith.cmpi eq, %c2_i32, %c0_i32 : i32
    %c1_i32 = arith.constant 1 : i32
    %8 = arith.select %7, %c1_i32, %c2_i32 : i32
    %9 = vector.broadcast %8 : i32 to vector<1x1x16xi32>
    %10 = arith.remsi %6, %9 : vector<1x1x16xi32>
    %c0_i32_5 = arith.constant 0 : i32
    %11 = vector.broadcast %c0_i32_5 : i32 to vector<1x1x16xi32>
    %12 = arith.cmpi ne, %10, %11 : vector<1x1x16xi32>
    %c0_i32_6 = arith.constant 0 : i32
    %13 = vector.broadcast %c0_i32_6 : i32 to vector<1x1x16xi32>
    %14 = arith.cmpi slt, %10, %13 : vector<1x1x16xi32>
    %c0_i32_7 = arith.constant 0 : i32
    %15 = arith.cmpi slt, %8, %c0_i32_7 : i32
    %16 = vector.broadcast %15 : i1 to vector<1x1x16xi1>
    %17 = vector.broadcast %16 : vector<1x1x16xi1> to vector<1x1x16xi1>
    %18 = arith.xori %14, %17 : vector<1x1x16xi1>
    %19 = arith.andi %18, %12 : vector<1x1x16xi1>
    %20 = vector.broadcast %8 : i32 to vector<1x1x16xi32>
    %21 = arith.addi %10, %20 : vector<1x1x16xi32>
    %22 = arith.select %19, %21, %10 : vector<1x1x16xi1>, vector<1x1x16xi32>
    %c0_i32_8 = arith.constant 0 : i32
    %23 = vector.broadcast %c0_i32_8 : i32 to vector<1x1x16xi32>
    %24 = arith.cmpi eq, %22, %23 : vector<1x1x16xi32>
    %cst_9 = arith.constant 0.000000e+00 : f32
    %25 = vector.broadcast %cst_9 : f32 to vector<2x8x16xf32>
    %26 = vector.shape_cast %24 : vector<1x1x16xi1> to vector<1x1x16xi1>
    %27 = vector.broadcast %26 : vector<1x1x16xi1> to vector<2x8x16xi1>
    %28 = arith.select %27, %5, %25 : vector<2x8x16xi1>, vector<2x8x16xf32>
    %29 = vector.extract_strided_slice %28 {offsets = [0, 0, 0], sizes = [2, 1, 16], strides = [1, 1, 1]} : vector<2x8x16xf32> to vector<2x1x16xf32>
    %30 = vector.shape_cast %29 : vector<2x1x16xf32> to vector<2x16xf32>
    %c0_10 = arith.constant 0 : index
    %c0_11 = arith.constant 0 : index
    %c0_12 = arith.constant 0 : index
    %31 = vector.load %arg3[%c0_10, %c0_11, %c0_12] : memref<2x15x16xf32, #tpu.memory_space<vmem>>, vector<2x1x16xf32>
    %32 = vector.shape_cast %31 : vector<2x1x16xf32> to vector<2x16xf32>
    %33 = vector.shape_cast %30 : vector<2x16xf32> to vector<2x1x16xf32>
    tpu.vector_store %arg3[%c0_10, %c0_11, %c0_12], %33 {strides = array<i32>} : memref<2x15x16xf32, #tpu.memory_space<vmem>>, vector<2x1x16xf32>,
    %34 = vector.extract_strided_slice %28 {offsets = [0, 1, 0], sizes = [2, 1, 16], strides = [1, 1, 1]} : vector<2x8x16xf32> to vector<2x1x16xf32>
    %35 = vector.shape_cast %34 : vector<2x1x16xf32> to vector<2x16xf32>
    %c0_13 = arith.constant 0 : index
    %c2 = arith.constant 2 : index
    %c0_14 = arith.constant 0 : index
    %36 = vector.load %arg3[%c0_13, %c2, %c0_14] : memref<2x15x16xf32, #tpu.memory_space<vmem>>, vector<2x1x16xf32>
    %37 = vector.shape_cast %36 : vector<2x1x16xf32> to vector<2x16xf32>
    %38 = vector.shape_cast %35 : vector<2x16xf32> to vector<2x1x16xf32>
    tpu.vector_store %arg3[%c0_13, %c2, %c0_14], %38 {strides = array<i32>} : memref<2x15x16xf32, #tpu.memory_space<vmem>>, vector<2x1x16xf32>,
    %39 = vector.extract_strided_slice %28 {offsets = [0, 2, 0], sizes = [2, 1, 16], strides = [1, 1, 1]} : vector<2x8x16xf32> to vector<2x1x16xf32>
    %40 = vector.shape_cast %39 : vector<2x1x16xf32> to vector<2x16xf32>
    %c0_15 = arith.constant 0 : index
    %c4 = arith.constant 4 : index
    %c0_16 = arith.constant 0 : index
    %41 = vector.load %arg3[%c0_15, %c4, %c0_16] : memref<2x15x16xf32, #tpu.memory_space<vmem>>, vector<2x1x16xf32>
    %42 = vector.shape_cast %41 : vector<2x1x16xf32> to vector<2x16xf32>
    %43 = vector.shape_cast %40 : vector<2x16xf32> to vector<2x1x16xf32>
    tpu.vector_store %arg3[%c0_15, %c4, %c0_16], %43 {strides = array<i32>} : memref<2x15x16xf32, #tpu.memory_space<vmem>>, vector<2x1x16xf32>,
    %44 = vector.extract_strided_slice %28 {offsets = [0, 3, 0], sizes = [2, 1, 16], strides = [1, 1, 1]} : vector<2x8x16xf32> to vector<2x1x16xf32>
    %45 = vector.shape_cast %44 : vector<2x1x16xf32> to vector<2x16xf32>
    %c0_17 = arith.constant 0 : index
    %c6 = arith.constant 6 : index
    %c0_18 = arith.constant 0 : index
    %46 = vector.load %arg3[%c0_17, %c6, %c0_18] : memref<2x15x16xf32, #tpu.memory_space<vmem>>, vector<2x1x16xf32>
    %47 = vector.shape_cast %46 : vector<2x1x16xf32> to vector<2x16xf32>
    %48 = vector.shape_cast %45 : vector<2x16xf32> to vector<2x1x16xf32>
    tpu.vector_store %arg3[%c0_17, %c6, %c0_18], %48 {strides = array<i32>} : memref<2x15x16xf32, #tpu.memory_space<vmem>>, vector<2x1x16xf32>,
    %49 = vector.extract_strided_slice %28 {offsets = [0, 4, 0], sizes = [2, 1, 16], strides = [1, 1, 1]} : vector<2x8x16xf32> to vector<2x1x16xf32>
    %50 = vector.shape_cast %49 : vector<2x1x16xf32> to vector<2x16xf32>
    %c0_19 = arith.constant 0 : index
    %c8 = arith.constant 8 : index
    %c0_20 = arith.constant 0 : index
    %51 = vector.load %arg3[%c0_19, %c8, %c0_20] : memref<2x15x16xf32, #tpu.memory_space<vmem>>, vector<2x1x16xf32>
    %52 = vector.shape_cast %51 : vector<2x1x16xf32> to vector<2x16xf32>
    %53 = vector.shape_cast %50 : vector<2x16xf32> to vector<2x1x16xf32>
    tpu.vector_store %arg3[%c0_19, %c8, %c0_20], %53 {strides = array<i32>} : memref<2x15x16xf32, #tpu.memory_space<vmem>>, vector<2x1x16xf32>,
    %54 = vector.extract_strided_slice %28 {offsets = [0, 5, 0], sizes = [2, 1, 16], strides = [1, 1, 1]} : vector<2x8x16xf32> to vector<2x1x16xf32>
    %55 = vector.shape_cast %54 : vector<2x1x16xf32> to vector<2x16xf32>
    %c0_21 = arith.constant 0 : index
    %c10 = arith.constant 10 : index
    %c0_22 = arith.constant 0 : index
    %56 = vector.load %arg3[%c0_21, %c10, %c0_22] : memref<2x15x16xf32, #tpu.memory_space<vmem>>, vector<2x1x16xf32>
    %57 = vector.shape_cast %56 : vector<2x1x16xf32> to vector<2x16xf32>
    %58 = vector.shape_cast %55 : vector<2x16xf32> to vector<2x1x16xf32>
    tpu.vector_store %arg3[%c0_21, %c10, %c0_22], %58 {strides = array<i32>} : memref<2x15x16xf32, #tpu.memory_space<vmem>>, vector<2x1x16xf32>,
    %59 = vector.extract_strided_slice %28 {offsets = [0, 6, 0], sizes = [2, 1, 16], strides = [1, 1, 1]} : vector<2x8x16xf32> to vector<2x1x16xf32>
    %60 = vector.shape_cast %59 : vector<2x1x16xf32> to vector<2x16xf32>
    %c0_23 = arith.constant 0 : index
    %c12 = arith.constant 12 : index
    %c0_24 = arith.constant 0 : index
    %61 = vector.load %arg3[%c0_23, %c12, %c0_24] : memref<2x15x16xf32, #tpu.memory_space<vmem>>, vector<2x1x16xf32>
    %62 = vector.shape_cast %61 : vector<2x1x16xf32> to vector<2x16xf32>
    %63 = vector.shape_cast %60 : vector<2x16xf32> to vector<2x1x16xf32>
    tpu.vector_store %arg3[%c0_23, %c12, %c0_24], %63 {strides = array<i32>} : memref<2x15x16xf32, #tpu.memory_space<vmem>>, vector<2x1x16xf32>,
    %64 = vector.extract_strided_slice %28 {offsets = [0, 7, 0], sizes = [2, 1, 16], strides = [1, 1, 1]} : vector<2x8x16xf32> to vector<2x1x16xf32>
    %65 = vector.shape_cast %64 : vector<2x1x16xf32> to vector<2x16xf32>
    %c0_25 = arith.constant 0 : index
    %c14 = arith.constant 14 : index
    %c0_26 = arith.constant 0 : index
    %66 = vector.load %arg3[%c0_25, %c14, %c0_26] : memref<2x15x16xf32, #tpu.memory_space<vmem>>, vector<2x1x16xf32>
    %67 = vector.shape_cast %66 : vector<2x1x16xf32> to vector<2x16xf32>
    %68 = vector.shape_cast %65 : vector<2x16xf32> to vector<2x1x16xf32>
    tpu.vector_store %arg3[%c0_25, %c14, %c0_26], %68 {strides = array<i32>} : memref<2x15x16xf32, #tpu.memory_space<vmem>>, vector<2x1x16xf32>,
    return
  }
  func.func @transform_0(%arg0: i32, %arg1: i32) -> (i32, i32, i32) {
    %c0_i32 = arith.constant 0 : i32
    %c0_i32_0 = arith.constant 0 : i32
    return %arg0, %arg1, %c0_i32 : i32, i32, i32
  }
  func.func @transform_1(%arg0: i32, %arg1: i32) -> (i32, i32, i32) {
    %c0_i32 = arith.constant 0 : i32
    %c0_i32_0 = arith.constant 0 : i32
    return %arg0, %arg1, %c0_i32 : i32, i32, i32
  }
}

</mosaic_0001>

<llo_original>
// kernel: tpu_custom_call.1
$region0: #{tpu_custom_call.1}
  #allocation0 [shape = 'u32[]', space=smem, size = 0x4, offset = 0x4, fixed_abs, tag = 'smem constant byte address 0x4 - core index']
  #allocation1 [shape = 'u32[144,128]{1,0:T(1,128)}', space=vmem, size = 0x12000, scoped, tag = 'internal scratch']
  %s0 = inlined_call_operand.hbm [shape: f32[8,8,8], index: 0, kind: input, shape index: {}]
  %s1 = inlined_call_operand.vmem [shape: f32[8,15,16], index: 1, kind: output, shape index: {}]
  %s2 = sld [smem:[#allocation0]]
  $region41: #{tpu_custom_call.1} parent=0
    _
  %s4 = ssub.s32 1, %s2
  %s5 = scalar_select 0, %s4, %s2
  $region1: #{tpu_custom_call.1} parent=0
    #allocation2 [shape = 'u8[16384]{0}', space=vmem, size = 0x4000, scoped, tag = 'input window, operand 0']
    #allocation3 [shape = 's32[2]{0}', space=sflag, size = 0x8, scoped, tag = 'scoped memory for tpu_custom_call.1']
    %6 = vsyncpa [#allocation3], 0
    %s7 = scalar_lea.sflag [#allocation3], 1
    %8 = vsyncpa %s7, 0
    loop: start=0, step=1, limit=6
    $region2: #{tpu_custom_call.1} parent=1 // loop_pre_header
      _
    $region3: #{tpu_custom_call.1} parent=1 // loop_header
      %s10 = sphi 0, %s14
      %p11 = scmp.ge.s32.totalorder %s10, 6
      %s17 = sphi 0, %s29
      %s18 = sphi 0, %s25
      %s19 = sphi 0, %s17
      %s20 = sphi 0, %s18
      %s21 = sphi 0, %s19
      %s22 = sphi 0, %s20
      %s34 = sphi 0, %s36
      %s37 = sphi 0, %s34
      %s38 = sphi 0, %s37
      %s54 = sphi 0, %s38
      %s62 = sphi 0, %s64
      %s65 = sphi 0, %s62
      %s66 = sphi 0, %s65
      %s82 = sphi 0, %s66
    $region4: #{tpu_custom_call.1} parent=1 // loop_header_branch
      %13 = sbr.rel (%p11) target = $region8
    $region5: #{tpu_custom_call.1} parent=1 // loop_body
      %s15 = ssub.s32 %s10, 1
      %s16 = ssub.s32 %s10, 2
      %s23 = sadd.s32 1, %s18
      %p24 = scmp.ge.s32.totalorder %s23, 1
      %s25 = scalar_select %p24, 0, %s23
      %s26 = sadd.s32 1, %s17
      %s27 = scalar_select %p24, %s26, %s17
      %p28 = scmp.ge.s32.totalorder %s27, 4
      %s29 = scalar_select %p28, 0, %s27
      %s30 = ssub.s32 %s17, %s29
      %s31 = ssub.s32 %s18, %s25
      %s32 = sor.u32 %s30, %s31
      %p33 = scmp.eq.s32.totalorder %s32, 0
      %s35 = sadd.s32 %s34, 1
      %s36 = scalar_select %p33, %s34, %s35
      %p39 = pneg %p33
      %p40 = scmp.eq.s32.totalorder %s10, 3
      %p41 = por %p39, %p40
      %p42 = scmp.ne.s32.totalorder %s34, %s37
      %p43 = scmp.eq.s32.totalorder %s10, 0
      %p44 = por %p42, %p43
      %p45 = scmp.ne.s32.totalorder %s34, %s37
      %p46 = scmp.eq.s32.totalorder %s15, 3
      %p47 = por %p45, %p46
      %p48 = scmp.ne.s32.totalorder %s37, %s38
      %p49 = scmp.eq.s32.totalorder %s15, 0
      %p50 = por %p48, %p49
      %p51 = scmp.ne.s32.totalorder %s37, %s38
      %p52 = scmp.eq.s32.totalorder %s16, 3
      %p53 = por %p51, %p52
      %p55 = scmp.ne.s32.totalorder %s38, %s54
      %p56 = scmp.eq.s32.totalorder %s16, 0
      %p57 = por %p55, %p56
      %s58 = ssub.s32 %s17, %s29
      %s59 = ssub.s32 %s18, %s25
      %s60 = sor.u32 %s58, %s59
      %p61 = scmp.eq.s32.totalorder %s60, 0
      %s63 = sadd.s32 %s62, 1
      %s64 = scalar_select %p61, %s62, %s63
      %p67 = pneg %p61
      %p68 = scmp.eq.s32.totalorder %s10, 3
      %p69 = por %p67, %p68
      %p70 = scmp.ne.s32.totalorder %s62, %s65
      %p71 = scmp.eq.s32.totalorder %s10, 0
      %p72 = por %p70, %p71
      %p73 = scmp.ne.s32.totalorder %s62, %s65
      %p74 = scmp.eq.s32.totalorder %s15, 3
      %p75 = por %p73, %p74
      %p76 = scmp.ne.s32.totalorder %s65, %s66
      %p77 = scmp.eq.s32.totalorder %s15, 0
      %p78 = por %p76, %p77
      %p79 = scmp.ne.s32.totalorder %s65, %s66
      %p80 = scmp.eq.s32.totalorder %s16, 3
      %p81 = por %p79, %p80
      %p83 = scmp.ne.s32.totalorder %s66, %s82
      %p84 = scmp.eq.s32.totalorder %s16, 0
      %p85 = por %p83, %p84
      %p86 = scmp.le.s32.totalorder 1, %s10
      %p87 = scmp.lt.s32.totalorder %s10, 5
      %p88 = pnand %p86, %p87
      %p89 = pneg %p88
      // Predicated region
      $region9: #{tpu_custom_call.1} parent=5 // pred_check
        _
      $region10: #{tpu_custom_call.1} parent=5 // pred_check_branch
        %91 = sbr.rel (%p88) target = $region12
      $region11: #{tpu_custom_call.1} parent=5 // pred_region
        %s92 = ssub.s32 %s10, 1
      $region12: #{tpu_custom_call.1} parent=5 // pred_fallthru
        _
      %p93 = scmp.lt.s32.totalorder %s10, 4
      // Predicated region
      $region13: #{tpu_custom_call.1} parent=5 // pred_check
        %p94 = pneg %p93
      $region14: #{tpu_custom_call.1} parent=5 // pred_check_branch
        %96 = sbr.rel (%p94) target = $region16
      $region15: #{tpu_custom_call.1} parent=5 // pred_region
        // Predicated region
        $region17: #{tpu_custom_call.1} parent=15 // pred_check
          %p97 = pneg %p44
        $region18: #{tpu_custom_call.1} parent=15 // pred_check_branch
          %99 = sbr.rel (%p97) target = $region20
        $region19: #{tpu_custom_call.1} parent=15 // pred_region
          %s100 = sand.u32 %s34, 1
          %s101 = scalar_lea.sflag [#allocation3], %s100
          %s102 = sand.u32 %s34, 1
          %s103 = smul.addr %s102, 16
          %s104 = scalar_lea.vmem [#allocation2], %s103
          %s105 = smul.u32 2, %s17
          %s107 = ssub.s32 256, 256
          %108 = vsyncadd %s101, %s107
          %s109 = sadd.s32 %s18, %s105
          %s110 = smul.addr %s109, 128
          %s111 = scalar_lea.hbm %s0, %s110
          %s112 = sshll.u32 %s104, 4
          %s113 = int_to_ptr.vmem [resolvable:$true] %s112
          %118 = dma.hbm_to_vmem [thread:$0]  %s111, 256, %s113, %s101, 128, 128, 8
        $region20: #{tpu_custom_call.1} parent=15 // pred_fallthru
          _
      $region16: #{tpu_custom_call.1} parent=5 // pred_fallthru
        _
      %p119 = scmp.le.s32.totalorder 1, %s10
      %p120 = scmp.lt.s32.totalorder %s10, 5
      %p121 = pnand %p119, %p120
      %p122 = pneg %p121
      // Predicated region
      $region21: #{tpu_custom_call.1} parent=5 // pred_check
        _
      $region22: #{tpu_custom_call.1} parent=5 // pred_check_branch
        %124 = sbr.rel (%p121) target = $region24
      $region23: #{tpu_custom_call.1} parent=5 // pred_region
        %s125 = ssub.s32 %s10, 1
        %s126 = sand.u32 %s37, 1
        %s127 = scalar_lea.sflag [#allocation3], %s126
        %s128 = sand.u32 %s37, 1
        %s129 = smul.addr %s128, 16
        %s130 = scalar_lea.vmem [#allocation2], %s129
        // Predicated region
        $region25: #{tpu_custom_call.1} parent=23 // pred_check
          %p131 = pneg %p50
        $region26: #{tpu_custom_call.1} parent=23 // pred_check_branch
          %133 = sbr.rel (%p131) target = $region28
        $region27: #{tpu_custom_call.1} parent=23 // pred_region
          %134 = dma.done %s127, 256
        $region28: #{tpu_custom_call.1} parent=23 // pred_fallthru
          _
        %s135 = sand.u32 %s37, 1
        %s136 = scalar_lea.sflag [#allocation3], %s135
        %s137 = sand.u32 %s37, 1
        %s138 = smul.addr %s137, 16
        %s139 = scalar_lea.vmem [#allocation2], %s138
        %p140 = pneg %p50
        %p141 = pneg %p47
        %p142 = pneg %p78
        %p143 = pneg %p75
        %s144 = smul.u32 2, %s19
        %s145 = smul.u32 2, %s20
        %p146 = scmp.lt.s32.totalorder %s144, 7
        %s147 = scalar_select %p146, %s144, 7
        %p148 = scmp.lt.s32.totalorder %s145, 1
        %s149 = scalar_select %p148, %s145, 1
        %s150 = smul.addr %s147, 2
        %s151 = sadd.s32 %s149, %s150
        %s152 = smul.addr %s151, 8
        %s153 = scalar_lea.vmem %s1, %s152
        %s154 = smul.u32 2, %s19
        %s155 = smul.u32 2, %s19
        %s156 = smul.u32 2, %s20
        %p157 = scmp.lt.s32.totalorder %s155, 7
        %s158 = scalar_select %p157, %s155, 7
        %p159 = scmp.lt.s32.totalorder %s156, 1
        %s160 = scalar_select %p159, %s156, 1
        %s161 = smul.addr %s158, 2
        %s162 = sadd.s32 %s160, %s161
        %s163 = smul.addr %s162, 8
        %s164 = scalar_lea.vmem %s1, %s163
        %s165 = smul.u32 2, %s19
        %s166 = smul.u32 2, %s20
        %vm167 = vcmask 130048
        %168 = vst.msk [vmem:[%s164] sm:$0xff] %vm167, 0.0
        %vm169 = vcmask 129024
        %170 = vst.msk [vmem:[%s164 + $0x8] sm:$0x7f] %vm169, 0.0
        %171 = vst.msk [vmem:[%s164 + $0x10] sm:$0xff] %vm167, 0.0
        %172 = vst.msk [vmem:[%s164 + $0x18] sm:$0x7f] %vm169, 0.0
        %v173 = vld [vmem:[%s130] sm:$0xff]
        %v174 = vld [vmem:[%s130 + $0x8] sm:$0xff]
        %v175 = vlaneseq
        %v176 = vshrl.u32 %v175, 7
        %v177 = vsub.s32 0, %v176
        %v178 = vrot.slane %v173, %v177
        %180 = vbcast.lane.b32.xlu0 %v178, 256
        %v181 = vpop.permute.xlu0 %180
        %v182 = vlaneseq
        %v183 = vshrl.u32 %v182, 7
        %v184 = vsub.s32 1, %v183
        %v185 = vrot.slane %v173, %v184
        %187 = vbcast.lane.b32.xlu0 %v185, 256
        %v188 = vpop.permute.xlu0 %187
        %v189 = vlaneseq
        %v190 = vshrl.u32 %v189, 7
        %v191 = vsub.s32 2, %v190
        %v192 = vrot.slane %v173, %v191
        %194 = vbcast.lane.b32.xlu0 %v192, 256
        %v195 = vpop.permute.xlu0 %194
        %v196 = vlaneseq
        %v197 = vshrl.u32 %v196, 7
        %v198 = vsub.s32 3, %v197
        %v199 = vrot.slane %v173, %v198
        %201 = vbcast.lane.b32.xlu0 %v199, 256
        %v202 = vpop.permute.xlu0 %201
        %v203 = vlaneseq
        %v204 = vshrl.u32 %v203, 7
        %v205 = vsub.s32 4, %v204
        %v206 = vrot.slane %v173, %v205
        %208 = vbcast.lane.b32.xlu0 %v206, 256
        %v209 = vpop.permute.xlu0 %208
        %v210 = vlaneseq
        %v211 = vshrl.u32 %v210, 7
        %v212 = vsub.s32 5, %v211
        %v213 = vrot.slane %v173, %v212
        %215 = vbcast.lane.b32.xlu0 %v213, 256
        %v216 = vpop.permute.xlu0 %215
        %v217 = vlaneseq
        %v218 = vshrl.u32 %v217, 7
        %v219 = vsub.s32 6, %v218
        %v220 = vrot.slane %v173, %v219
        %222 = vbcast.lane.b32.xlu0 %v220, 256
        %v223 = vpop.permute.xlu0 %222
        %v224 = vlaneseq
        %v225 = vshrl.u32 %v224, 7
        %v226 = vsub.s32 7, %v225
        %v227 = vrot.slane %v173, %v226
        %229 = vbcast.lane.b32.xlu0 %v227, 256
        %v230 = vpop.permute.xlu0 %229
        %v231 = vlaneseq
        %v232 = vshrl.u32 %v231, 7
        %v233 = vsub.s32 0, %v232
        %v234 = vrot.slane %v174, %v233
        %236 = vbcast.lane.b32.xlu0 %v234, 256
        %v237 = vpop.permute.xlu0 %236
        %v238 = vlaneseq
        %v239 = vshrl.u32 %v238, 7
        %v240 = vsub.s32 1, %v239
        %v241 = vrot.slane %v174, %v240
        %243 = vbcast.lane.b32.xlu0 %v241, 256
        %v244 = vpop.permute.xlu0 %243
        %v245 = vlaneseq
        %v246 = vshrl.u32 %v245, 7
        %v247 = vsub.s32 2, %v246
        %v248 = vrot.slane %v174, %v247
        %250 = vbcast.lane.b32.xlu0 %v248, 256
        %v251 = vpop.permute.xlu0 %250
        %v252 = vlaneseq
        %v253 = vshrl.u32 %v252, 7
        %v254 = vsub.s32 3, %v253
        %v255 = vrot.slane %v174, %v254
        %257 = vbcast.lane.b32.xlu0 %v255, 256
        %v258 = vpop.permute.xlu0 %257
        %v259 = vlaneseq
        %v260 = vshrl.u32 %v259, 7
        %v261 = vsub.s32 4, %v260
        %v262 = vrot.slane %v174, %v261
        %264 = vbcast.lane.b32.xlu0 %v262, 256
        %v265 = vpop.permute.xlu0 %264
        %v266 = vlaneseq
        %v267 = vshrl.u32 %v266, 7
        %v268 = vsub.s32 5, %v267
        %v269 = vrot.slane %v174, %v268
        %271 = vbcast.lane.b32.xlu0 %v269, 256
        %v272 = vpop.permute.xlu0 %271
        %v273 = vlaneseq
        %v274 = vshrl.u32 %v273, 7
        %v275 = vsub.s32 6, %v274
        %v276 = vrot.slane %v174, %v275
        %278 = vbcast.lane.b32.xlu0 %v276, 256
        %v279 = vpop.permute.xlu0 %278
        %v280 = vlaneseq
        %v281 = vshrl.u32 %v280, 7
        %v282 = vsub.s32 7, %v281
        %v283 = vrot.slane %v174, %v282
        %285 = vbcast.lane.b32.xlu0 %v283, 256
        %v286 = vpop.permute.xlu0 %285
        %v287 = vcombine.low %v181, %v195
        %v288 = vcombine.high %v181, %v195
        %v290 = vunpack.c.l.s4 1983009808
        %v291 = vunpack.c.0.s8 %v290
        %v292 = vlaneseq
        %v293 = vshrl.u32 %v292, 7
        %v294 = vsub.s32 %v291, %v293
        %v295 = vrot.slane %v287, %v294
        %v297 = vunpack.c.l.s4 1983009808
        %v298 = vunpack.c.0.s8 %v297
        %v299 = vlaneseq
        %v300 = vshrl.u32 %v299, 7
        %v301 = vsub.s32 %v298, %v300
        %v302 = vrot.slane %v288, %v301
        %v303 = vcombine.low %v188, %v202
        %v304 = vcombine.high %v188, %v202
        %v306 = vunpack.c.l.s4 1983009808
        %v307 = vunpack.c.0.s8 %v306
        %v308 = vlaneseq
        %v309 = vshrl.u32 %v308, 7
        %v310 = vsub.s32 %v307, %v309
        %v311 = vrot.slane %v303, %v310
        %v313 = vunpack.c.l.s4 1983009808
        %v314 = vunpack.c.0.s8 %v313
        %v315 = vlaneseq
        %v316 = vshrl.u32 %v315, 7
        %v317 = vsub.s32 %v314, %v316
        %v318 = vrot.slane %v304, %v317
        %v319 = vcombine.low %v209, %v223
        %v320 = vcombine.high %v209, %v223
        %v322 = vunpack.c.l.s4 1983009808
        %v323 = vunpack.c.0.s8 %v322
        %v324 = vlaneseq
        %v325 = vshrl.u32 %v324, 7
        %v326 = vsub.s32 %v323, %v325
        %v327 = vrot.slane %v319, %v326
        %v329 = vunpack.c.l.s4 1983009808
        %v330 = vunpack.c.0.s8 %v329
        %v331 = vlaneseq
        %v332 = vshrl.u32 %v331, 7
        %v333 = vsub.s32 %v330, %v332
        %v334 = vrot.slane %v320, %v333
        %v335 = vcombine.low %v216, %v230
        %v336 = vcombine.high %v216, %v230
        %v338 = vunpack.c.l.s4 1983009808
        %v339 = vunpack.c.0.s8 %v338
        %v340 = vlaneseq
        %v341 = vshrl.u32 %v340, 7
        %v342 = vsub.s32 %v339, %v341
        %v343 = vrot.slane %v335, %v342
        %v345 = vunpack.c.l.s4 1983009808
        %v346 = vunpack.c.0.s8 %v345
        %v347 = vlaneseq
        %v348 = vshrl.u32 %v347, 7
        %v349 = vsub.s32 %v346, %v348
        %v350 = vrot.slane %v336, %v349
        %v351 = vcombine.low %v295, %v311
        %v352 = vcombine.high %v295, %v311
        %v354 = vunpack.c.l.s4 1934713408
        %v355 = vunpack.c.0.s8 %v354
        %v356 = vlaneseq
        %v357 = vshrl.u32 %v356, 7
        %v358 = vsub.s32 %v355, %v357
        %v359 = vrot.slane %v351, %v358
        %v361 = vunpack.c.l.s4 1934713408
        %v362 = vunpack.c.0.s8 %v361
        %v363 = vlaneseq
        %v364 = vshrl.u32 %v363, 7
        %v365 = vsub.s32 %v362, %v364
        %v366 = vrot.slane %v352, %v365
        %v367 = vcombine.low %v302, %v318
        %v368 = vcombine.high %v302, %v318
        %v370 = vunpack.c.l.s4 1934713408
        %v371 = vunpack.c.0.s8 %v370
        %v372 = vlaneseq
        %v373 = vshrl.u32 %v372, 7
        %v374 = vsub.s32 %v371, %v373
        %v375 = vrot.slane %v367, %v374
        %v377 = vunpack.c.l.s4 1934713408
        %v378 = vunpack.c.0.s8 %v377
        %v379 = vlaneseq
        %v380 = vshrl.u32 %v379, 7
        %v381 = vsub.s32 %v378, %v380
        %v382 = vrot.slane %v368, %v381
        %v383 = vcombine.low %v327, %v343
        %v384 = vcombine.high %v327, %v343
        %v386 = vunpack.c.l.s4 1934713408
        %v387 = vunpack.c.0.s8 %v386
        %v388 = vlaneseq
        %v389 = vshrl.u32 %v388, 7
        %v390 = vsub.s32 %v387, %v389
        %v391 = vrot.slane %v383, %v390
        %v393 = vunpack.c.l.s4 1934713408
        %v394 = vunpack.c.0.s8 %v393
        %v395 = vlaneseq
        %v396 = vshrl.u32 %v395, 7
        %v397 = vsub.s32 %v394, %v396
        %v398 = vrot.slane %v384, %v397
        %v399 = vcombine.low %v334, %v350
        %v400 = vcombine.high %v334, %v350
        %v402 = vunpack.c.l.s4 1934713408
        %v403 = vunpack.c.0.s8 %v402
        %v404 = vlaneseq
        %v405 = vshrl.u32 %v404, 7
        %v406 = vsub.s32 %v403, %v405
        %v407 = vrot.slane %v399, %v406
        %v409 = vunpack.c.l.s4 1934713408
        %v410 = vunpack.c.0.s8 %v409
        %v411 = vlaneseq
        %v412 = vshrl.u32 %v411, 7
        %v413 = vsub.s32 %v410, %v412
        %v414 = vrot.slane %v400, %v413
        %v415 = vcombine.low %v359, %v391
        %v416 = vcombine.high %v359, %v391
        %v417 = vcombine.low %v366, %v398
        %v418 = vcombine.high %v366, %v398
        %v419 = vcombine.low %v375, %v407
        %v420 = vcombine.high %v375, %v407
        %v421 = vcombine.low %v382, %v414
        %v422 = vcombine.high %v382, %v414
        %v423 = vcombine.low %v237, %v251
        %v424 = vcombine.high %v237, %v251
        %v426 = vunpack.c.l.s4 1983009808
        %v427 = vunpack.c.0.s8 %v426
        %v428 = vlaneseq
        %v429 = vshrl.u32 %v428, 7
        %v430 = vsub.s32 %v427, %v429
        %v431 = vrot.slane %v423, %v430
        %v433 = vunpack.c.l.s4 1983009808
        %v434 = vunpack.c.0.s8 %v433
        %v435 = vlaneseq
        %v436 = vshrl.u32 %v435, 7
        %v437 = vsub.s32 %v434, %v436
        %v438 = vrot.slane %v424, %v437
        %v439 = vcombine.low %v244, %v258
        %v440 = vcombine.high %v244, %v258
        %v442 = vunpack.c.l.s4 1983009808
        %v443 = vunpack.c.0.s8 %v442
        %v444 = vlaneseq
        %v445 = vshrl.u32 %v444, 7
        %v446 = vsub.s32 %v443, %v445
        %v447 = vrot.slane %v439, %v446
        %v449 = vunpack.c.l.s4 1983009808
        %v450 = vunpack.c.0.s8 %v449
        %v451 = vlaneseq
        %v452 = vshrl.u32 %v451, 7
        %v453 = vsub.s32 %v450, %v452
        %v454 = vrot.slane %v440, %v453
        %v455 = vcombine.low %v265, %v279
        %v456 = vcombine.high %v265, %v279
        %v458 = vunpack.c.l.s4 1983009808
        %v459 = vunpack.c.0.s8 %v458
        %v460 = vlaneseq
        %v461 = vshrl.u32 %v460, 7
        %v462 = vsub.s32 %v459, %v461
        %v463 = vrot.slane %v455, %v462
        %v465 = vunpack.c.l.s4 1983009808
        %v466 = vunpack.c.0.s8 %v465
        %v467 = vlaneseq
        %v468 = vshrl.u32 %v467, 7
        %v469 = vsub.s32 %v466, %v468
        %v470 = vrot.slane %v456, %v469
        %v471 = vcombine.low %v272, %v286
        %v472 = vcombine.high %v272, %v286
        %v474 = vunpack.c.l.s4 1983009808
        %v475 = vunpack.c.0.s8 %v474
        %v476 = vlaneseq
        %v477 = vshrl.u32 %v476, 7
        %v478 = vsub.s32 %v475, %v477
        %v479 = vrot.slane %v471, %v478
        %v481 = vunpack.c.l.s4 1983009808
        %v482 = vunpack.c.0.s8 %v481
        %v483 = vlaneseq
        %v484 = vshrl.u32 %v483, 7
        %v485 = vsub.s32 %v482, %v484
        %v486 = vrot.slane %v472, %v485
        %v487 = vcombine.low %v431, %v447
        %v488 = vcombine.high %v431, %v447
        %v490 = vunpack.c.l.s4 1934713408
        %v491 = vunpack.c.0.s8 %v490
        %v492 = vlaneseq
        %v493 = vshrl.u32 %v492, 7
        %v494 = vsub.s32 %v491, %v493
        %v495 = vrot.slane %v487, %v494
        %v497 = vunpack.c.l.s4 1934713408
        %v498 = vunpack.c.0.s8 %v497
        %v499 = vlaneseq
        %v500 = vshrl.u32 %v499, 7
        %v501 = vsub.s32 %v498, %v500
        %v502 = vrot.slane %v488, %v501
        %v503 = vcombine.low %v438, %v454
        %v504 = vcombine.high %v438, %v454
        %v506 = vunpack.c.l.s4 1934713408
        %v507 = vunpack.c.0.s8 %v506
        %v508 = vlaneseq
        %v509 = vshrl.u32 %v508, 7
        %v510 = vsub.s32 %v507, %v509
        %v511 = vrot.slane %v503, %v510
        %v513 = vunpack.c.l.s4 1934713408
        %v514 = vunpack.c.0.s8 %v513
        %v515 = vlaneseq
        %v516 = vshrl.u32 %v515, 7
        %v517 = vsub.s32 %v514, %v516
        %v518 = vrot.slane %v504, %v517
        %v519 = vcombine.low %v463, %v479
        %v520 = vcombine.high %v463, %v479
        %v522 = vunpack.c.l.s4 1934713408
        %v523 = vunpack.c.0.s8 %v522
        %v524 = vlaneseq
        %v525 = vshrl.u32 %v524, 7
        %v526 = vsub.s32 %v523, %v525
        %v527 = vrot.slane %v519, %v526
        %v529 = vunpack.c.l.s4 1934713408
        %v530 = vunpack.c.0.s8 %v529
        %v531 = vlaneseq
        %v532 = vshrl.u32 %v531, 7
        %v533 = vsub.s32 %v530, %v532
        %v534 = vrot.slane %v520, %v533
        %v535 = vcombine.low %v470, %v486
        %v536 = vcombine.high %v470, %v486
        %v538 = vunpack.c.l.s4 1934713408
        %v539 = vunpack.c.0.s8 %v538
        %v540 = vlaneseq
        %v541 = vshrl.u32 %v540, 7
        %v542 = vsub.s32 %v539, %v541
        %v543 = vrot.slane %v535, %v542
        %v545 = vunpack.c.l.s4 1934713408
        %v546 = vunpack.c.0.s8 %v545
        %v547 = vlaneseq
        %v548 = vshrl.u32 %v547, 7
        %v549 = vsub.s32 %v546, %v548
        %v550 = vrot.slane %v536, %v549
        %v551 = vcombine.low %v495, %v527
        %v552 = vcombine.high %v495, %v527
        %v553 = vcombine.low %v502, %v534
        %v554 = vcombine.high %v502, %v534
        %v555 = vcombine.low %v511, %v543
        %v556 = vcombine.high %v511, %v543
        %v557 = vcombine.low %v518, %v550
        %v558 = vcombine.high %v518, %v550
        %561 = vrot.lane.b32.xlu0 %v416, 2
        %v562 = vpop.permute.xlu0 %561
        %563 = vrot.lane.b32.xlu0 %v552, 2
        %v564 = vpop.permute.xlu0 %563
        %569 = vrot.lane.b32.xlu0 %v417, 4
        %v570 = vpop.permute.xlu0 %569
        %571 = vrot.lane.b32.xlu0 %v553, 4
        %v572 = vpop.permute.xlu0 %571
        %577 = vrot.lane.b32.xlu0 %v418, 6
        %v578 = vpop.permute.xlu0 %577
        %579 = vrot.lane.b32.xlu0 %v554, 6
        %v580 = vpop.permute.xlu0 %579
        %585 = vrot.lane.b32.xlu0 %v419, 8
        %v586 = vpop.permute.xlu0 %585
        %587 = vrot.lane.b32.xlu0 %v555, 8
        %v588 = vpop.permute.xlu0 %587
        %593 = vrot.lane.b32.xlu0 %v420, 10
        %v594 = vpop.permute.xlu0 %593
        %595 = vrot.lane.b32.xlu0 %v556, 10
        %v596 = vpop.permute.xlu0 %595
        %601 = vrot.lane.b32.xlu0 %v421, 12
        %v602 = vpop.permute.xlu0 %601
        %603 = vrot.lane.b32.xlu0 %v557, 12
        %v604 = vpop.permute.xlu0 %603
        %609 = vrot.lane.b32.xlu0 %v422, 14
        %v610 = vpop.permute.xlu0 %609
        %611 = vrot.lane.b32.xlu0 %v558, 14
        %v612 = vpop.permute.xlu0 %611
        %vm615 = vcmask 15360
        %v616 = vsel %vm615, %v415, %v562
        %v617 = vsel %vm615, %v551, %v564
        %vm618 = vcmask 31744
        %v619 = vsel %vm618, %v616, %v570
        %v620 = vsel %vm618, %v617, %v572
        %vm621 = vcmask 48128
        %v622 = vsel %vm621, %v619, %v578
        %v623 = vsel %vm621, %v620, %v580
        %vm624 = vcmask 64512
        %v625 = vsel %vm624, %v622, %v586
        %v626 = vsel %vm624, %v623, %v588
        %vm627 = vcmask 80896
        %v628 = vsel %vm627, %v625, %v594
        %v629 = vsel %vm627, %v626, %v596
        %vm630 = vcmask 97280
        %v631 = vsel %vm630, %v628, %v602
        %v632 = vsel %vm630, %v629, %v604
        %vm633 = vcmask 113664
        %v634 = vsel %vm633, %v631, %v610
        %v635 = vsel %vm633, %v632, %v612
        %v636 = vlaneseq
        %v637 = vand.u32 %v636, 127
        %vm638 = vcmp.lt.s32.totalorder %v637, 0
        %v639 = vsub.s32 0, %v637
        %v640 = vsel %vm638, %v639, %v637
        %v641 = vshrl.u32 %v640, 1
        %v642 = vand.u32 %v640, 1
        %v643 = vsub.s32 0, %v642
        %v644 = vsel %vm638, %v643, %v642
        %vm645 = vcmp.ne.s32.totalorder %v644, 0
        %vm646 = vcmp.lt.s32.totalorder %v644, 0
        %vm647 = vmand %vm646, %vm645
        %v648 = vadd.s32 %v644, 2
        %v649 = vsel %vm647, %v648, %v644
        %vm650 = vcmp.eq.s32.totalorder %v649, 0
        %v651 = vsel %vm650, 1, 0
        %vm652 = vcmp.eq.s32.totalorder %v651, 1
        %v653 = vsel %vm652, %v634, 0.0
        %v654 = vsel %vm652, %v635, 0.0
        %vm655 = vcmask 122880
        %656 = vst.msk [vmem:[%s164] sm:$0x1] %vm655, %v653
        %657 = vst.msk [vmem:[%s164 + $0x10] sm:$0x1] %vm655, %v654
        %vm658 = vcmask 123905
        %659 = vst.msk [vmem:[%s164 + $0x1] sm:$0x2] %vm658, %v653
        %660 = vst.msk [vmem:[%s164 + $0x11] sm:$0x2] %vm658, %v654
        %vm661 = vcmask 124930
        %662 = vst.msk [vmem:[%s164 + $0x2] sm:$0x4] %vm661, %v653
        %663 = vst.msk [vmem:[%s164 + $0x12] sm:$0x4] %vm661, %v654
        %vm664 = vcmask 125955
        %665 = vst.msk [vmem:[%s164 + $0x3] sm:$0x8] %vm664, %v653
        %666 = vst.msk [vmem:[%s164 + $0x13] sm:$0x8] %vm664, %v654
        %vm667 = vcmask 126980
        %668 = vst.msk [vmem:[%s164 + $0x4] sm:$0x10] %vm667, %v653
        %669 = vst.msk [vmem:[%s164 + $0x14] sm:$0x10] %vm667, %v654
        %vm670 = vcmask 128005
        %671 = vst.msk [vmem:[%s164 + $0x5] sm:$0x20] %vm670, %v653
        %672 = vst.msk [vmem:[%s164 + $0x15] sm:$0x20] %vm670, %v654
        %vm673 = vcmask 129030
        %674 = vst.msk [vmem:[%s164 + $0x6] sm:$0x40] %vm673, %v653
        %675 = vst.msk [vmem:[%s164 + $0x16] sm:$0x40] %vm673, %v654
        %vm676 = vcmask 130055
        %677 = vst.msk [vmem:[%s164 + $0x7] sm:$0x80] %vm676, %v653
        %678 = vst.msk [vmem:[%s164 + $0x17] sm:$0x80] %vm676, %v654
        %s679 = smul.u32 2, %s19
        %s680 = smul.u32 2, %s20
        %p681 = scmp.lt.s32.totalorder %s679, 7
        %s682 = scalar_select %p681, %s679, 7
        %p683 = scmp.lt.s32.totalorder %s680, 1
        %s684 = scalar_select %p683, %s680, 1
        %s685 = smul.addr %s682, 2
        %s686 = sadd.s32 %s684, %s685
        %s687 = smul.addr %s686, 8
        %s688 = scalar_lea.vmem %s1, %s687
        // Predicated region
        $region29: #{tpu_custom_call.1} parent=23 // pred_check
          %p689 = pneg %p75
        $region30: #{tpu_custom_call.1} parent=23 // pred_check_branch
          %691 = sbr.rel (%p689) target = $region32
        $region31: #{tpu_custom_call.1} parent=23 // pred_region
          %s692 = smul.u32 2, %s19
          %s693 = smul.u32 2, %s20
        $region32: #{tpu_custom_call.1} parent=23 // pred_fallthru
          _
      $region24: #{tpu_custom_call.1} parent=5 // pred_fallthru
        _
      %p694 = scmp.le.s32.totalorder 2, %s10
      // Predicated region
      $region33: #{tpu_custom_call.1} parent=5 // pred_check
        %p695 = pneg %p694
      $region34: #{tpu_custom_call.1} parent=5 // pred_check_branch
        %697 = sbr.rel (%p695) target = $region36
      $region35: #{tpu_custom_call.1} parent=5 // pred_region
        %s698 = ssub.s32 %s10, 2
        // Predicated region
        $region37: #{tpu_custom_call.1} parent=35 // pred_check
          %p699 = pneg %p81
        $region38: #{tpu_custom_call.1} parent=35 // pred_check_branch
          %701 = sbr.rel (%p699) target = $region40
        $region39: #{tpu_custom_call.1} parent=35 // pred_region
          %s702 = smul.u32 2, %s21
          %s703 = smul.u32 2, %s22
          %p704 = scmp.lt.s32.totalorder %s702, 7
          %s705 = scalar_select %p704, %s702, 7
          %p706 = scmp.lt.s32.totalorder %s703, 1
          %s707 = scalar_select %p706, %s703, 1
          %s708 = smul.addr %s705, 2
          %s709 = sadd.s32 %s707, %s708
          %s710 = smul.addr %s709, 8
          %s711 = scalar_lea.vmem %s1, %s710
        $region40: #{tpu_custom_call.1} parent=35 // pred_fallthru
          _
      $region36: #{tpu_custom_call.1} parent=5 // pred_fallthru
        _
    $region6: #{tpu_custom_call.1} parent=1 // loop_footer
      %s14 = sadd.s32 1, %s10
    $region7: #{tpu_custom_call.1} parent=1 // loop_footer_branch
      %9 = sbr.rel target = $region3
    $region8: #{tpu_custom_call.1} parent=1 // loop_exit
      _
    %712 = vsyncpa [#allocation3], 1
    %s713 = scalar_lea.sflag [#allocation3], 1
    %714 = vsyncpa %s713, 1

</llo_original>
